<compile_context>
chip_gen: v7x
topology: tpu7x:2x2x1
jax: 0.10.0
libtpu: 0.0.40
codegen_flags: <defaults>
</compile_context>

<pallas_src>
import jax
import jax.numpy as jnp
from jax.experimental import pallas as pl
from jax.experimental.pallas import tpu as pltpu


def _upsample_conv_kernel(xw_ref, m_ref, b_ref, o_ref):
    # xw_ref: (1, 3, H, C*W)   bf16  pre-shifted row windows [a-1 | a | a+1] of image n
    # m_ref : (3, C*W, 4*W*C)  bf16  folded conv weights (one K-block per row window)
    # b_ref : (1, 4*W*C)       f32   bias tiled over the (p, b, q, co) lanes
    # o_ref : (1, H, 4*W*C)    f32   rows 2a+{0,1} of the upsampled+convolved output
    acc = jnp.dot(xw_ref[0, 0], m_ref[0], preferred_element_type=jnp.float32)
    acc += jnp.dot(xw_ref[0, 1], m_ref[1], preferred_element_type=jnp.float32)
    acc += jnp.dot(xw_ref[0, 2], m_ref[2], preferred_element_type=jnp.float32)
    o_ref[0] = (acc + b_ref[...]).astype(o_ref.dtype)   # lane-dense (H, 4*W*C) store


def upsample_forward(x_nchw, w_oihw, bias):
    """Equivalent of: F.interpolate(x, 2x, 'nearest') -> Conv2d(C, C, 3, padding=1)."""
    N, C, H, W = x_nchw.shape
    f32 = jnp.float32
    CW = C * W
    OUTC = 4 * W * C          # (p, b, q, co) columns of one output row-pair

    # ---- parameter folding (tiny; constant-folded / cached under jit) -------------
    w_hwio = jnp.transpose(w_oihw, (2, 3, 1, 0)).astype(f32)            # (ky, kx, ci, co)
    # A[p][t, ky]: weight of original 3x3 row-tap ky on merged 2-tap t at row parity p.
    A = jnp.array([[[1.0, 0.0, 0.0],
                    [0.0, 1.0, 1.0]],
                   [[1.0, 1.0, 0.0],
                    [0.0, 0.0, 1.0]]], f32)
    hp = jax.lax.Precision.HIGHEST
    # wc[p, q, t, j, ci, co]: merged 2x2 conv weights for subpixel phase (p, q).
    wc = jnp.einsum('pty,qjx,yxcd->pqtjcd', A, A, w_hwio, precision=hp)
    # Row-window selector: window i (rows a-1, a, a+1) used by merged row-tap t is i=p+t.
    pi = jnp.arange(2)[:, None, None]
    ti = jnp.arange(2)[None, :, None]
    ii = jnp.arange(3)[None, None, :]
    rowsel = (ii == pi + ti).astype(f32)                                # (p, t, i)
    # Column selector: input column B feeding output column b at phase q, merged tap j
    # is B = b + q + j - 1 (out-of-range B == column zero padding -> simply omitted).
    qi = jnp.arange(2)[:, None, None, None]
    ji = jnp.arange(2)[None, :, None, None]
    bi = jnp.arange(W)[None, None, :, None]
    Bi = jnp.arange(W)[None, None, None, :]
    colsel = (Bi == bi + qi + ji - 1).astype(f32)                       # (q, j, b, B)
    # M[i][(ci, B), (p, b, q, co)] -- folds taps, width conv, column pad and BOTH phases.
    m = jnp.einsum('pqtjcd,pti,qjbB->icBpbqd', wc, rowsel, colsel, precision=hp)
    m = m.reshape(3, CW, OUTC).astype(jnp.bfloat16)
    bias_row = jnp.tile(bias.astype(f32), 2 * 2 * W)[None, :]           # (1, 4*W*C)

    # ---- input layout plumbing: (ci, col)-flattened rows, zero row padding, three ---
    # ---- shifted bf16 row windows (all over the small 1x input; fused by XLA) ------
    x_r = jnp.transpose(x_nchw, (0, 2, 1, 3)).reshape(N, H, CW)
    zrow = jnp.zeros((N, 1, CW), x_r.dtype)
    x_pad = jnp.concatenate([zrow, x_r, zrow], axis=1)                  # (N, H+2, CW)
    x_win = jnp.stack([x_pad[:, 0:H], x_pad[:, 1:H + 1], x_pad[:, 2:H + 2]],
                      axis=1).astype(jnp.bfloat16)                      # (N, 3, H, CW)

    # ---- Pallas kernel: one grid step per image (both v7x TCs busy at N >= 2) ------
    out = pl.pallas_call(
        _upsample_conv_kernel,
        out_shape=jax.ShapeDtypeStruct((N, H, OUTC), f32),
        grid_spec=pltpu.PrefetchScalarGridSpec(
            num_scalar_prefetch=0,
            grid=(N,),
            in_specs=[
                pl.BlockSpec((1, 3, H, CW), lambda n: (n, 0, 0, 0)),
                pl.BlockSpec((3, CW, OUTC), lambda n: (0, 0, 0)),   # resident RHS
                pl.BlockSpec((1, OUTC), lambda n: (0, 0)),
            ],
            out_specs=pl.BlockSpec((1, H, OUTC), lambda n: (n, 0, 0)),
        ),
        compiler_params=pltpu.CompilerParams(
            dimension_semantics=("parallel",),
            vmem_limit_bytes=4 * 1024 * 1024,
        ),
    )(x_win, m, bias_row)

    # ---- glue: the single remaining full pass over the 4x output (-> NCHW) --------
    y = out.reshape(N, H, 2, W, 2, C)            # [n, a, p, b, q, co]
    y = jnp.transpose(y, (0, 5, 1, 2, 3, 4))     # [n, co, a, p, b, q]
    return y.reshape(N, C, 2 * H, 2 * W)         # rows 2a+p, cols 2b+q


def reference_forward(x_nchw, w_oihw, bias):
    """Plain-JAX f32 reference: nearest-2x upsample + 3x3 'same' conv (NCHW)."""
    x_up = jnp.repeat(jnp.repeat(x_nchw, 2, axis=2), 2, axis=3)
    y = jax.lax.conv_general_dilated(
        x_up, w_oihw, window_strides=(1, 1), padding=((1, 1), (1, 1)),
        dimension_numbers=('NCHW', 'OIHW', 'NCHW'))
    return y + bias.reshape(1, -1, 1, 1)


if __name__ == "__main__":
    key = jax.random.PRNGKey(0)
    k_x, k_w, k_b = jax.random.split(key, 3)

    N, C, H, W = 2, 4, 16, 16
    x = jax.random.normal(k_x, (N, C, H, W), jnp.float32)

    # Deterministic Conv2d(C, C, kernel_size=3) parameters (PyTorch-style
    # uniform(-1/sqrt(fan_in), 1/sqrt(fan_in)) init, not a checkpoint load).
    fan_in = C * 3 * 3
    bound = 1.0 / (fan_in ** 0.5)
    w = jax.random.uniform(k_w, (C, C, 3, 3), jnp.float32, -bound, bound)
    b = jax.random.uniform(k_b, (C,), jnp.float32, -bound, bound)

    fwd = jax.jit(upsample_forward)
    y = jax.block_until_ready(fwd(x, w, b))

    y_ref = reference_forward(x, w, b)
    assert y.shape == (N, C, 2 * H, 2 * W), y.shape
    # bf16 MXU operands with f32 accumulation -> ~1e-2 worst-case abs error here.
    max_err = float(jnp.max(jnp.abs(y - y_ref)))
    assert max_err < 5e-2, max_err

    print("KERNEL_OK")
</pallas_src>

<mosaic_0001>
module attributes {stable_mosaic.version = 11 : i64} {
  func.func @_upsample_conv_kernel(%arg0: i32, %arg1: memref<1x3x16x64xbf16, #tpu.memory_space<vmem>>, %arg2: memref<3x64x256xbf16, #tpu.memory_space<vmem>>, %arg3: memref<1x256xf32, #tpu.memory_space<vmem>>, %arg4: memref<1x16x256xf32, #tpu.memory_space<vmem>>) attributes {dimension_semantics = [#tpu.dimension_semantics<parallel>], iteration_bounds = array<i64: 2>, scalar_prefetch = 0 : i64, scratch_operands = 0 : i64, tpu.core_type = #tpu.core_type<tc>, window_params = [{transform_indices = @transform_0, window_bounds = array<i64: 1, 3, 16, 64>}, {pipeline_mode = #tpu.pipeline_mode<synchronous>, transform_indices = @transform_1, window_bounds = array<i64: 3, 64, 256>}, {pipeline_mode = #tpu.pipeline_mode<synchronous>, transform_indices = @transform_2, window_bounds = array<i64: 1, 256>}, {transform_indices = @transform_3, window_bounds = array<i64: 1, 16, 256>}]} {
    %c0 = arith.constant 0 : index
    %c0_0 = arith.constant 0 : index
    %c0_1 = arith.constant 0 : index
    %c0_2 = arith.constant 0 : index
    %0 = vector.load %arg1[%c0, %c0_0, %c0_1, %c0_2] : memref<1x3x16x64xbf16, #tpu.memory_space<vmem>>, vector<1x1x16x64xbf16>
    %1 = vector.shape_cast %0 : vector<1x1x16x64xbf16> to vector<16x64xbf16>
    %c0_3 = arith.constant 0 : index
    %c0_4 = arith.constant 0 : index
    %c0_5 = arith.constant 0 : index
    %2 = vector.load %arg2[%c0_3, %c0_4, %c0_5] : memref<3x64x256xbf16, #tpu.memory_space<vmem>>, vector<1x64x256xbf16>
    %3 = vector.shape_cast %2 : vector<1x64x256xbf16> to vector<64x256xbf16>
    %cst = arith.constant dense<0.000000e+00> : vector<16x256xf32>
    %4 = tpu.matmul %1, %3, %cst {dimension_numbers = #tpu.dot_dimension_numbers<[1], [0], [0], [1], [0, 0, 1, 1], [], []>} : vector<16x64xbf16>, vector<64x256xbf16>, vector<16x256xf32> -> vector<16x256xf32>
    %c0_6 = arith.constant 0 : index
    %c1 = arith.constant 1 : index
    %c0_7 = arith.constant 0 : index
    %c0_8 = arith.constant 0 : index
    %5 = vector.load %arg1[%c0_6, %c1, %c0_7, %c0_8] : memref<1x3x16x64xbf16, #tpu.memory_space<vmem>>, vector<1x1x16x64xbf16>
    %6 = vector.shape_cast %5 : vector<1x1x16x64xbf16> to vector<16x64xbf16>
    %c1_9 = arith.constant 1 : index
    %c0_10 = arith.constant 0 : index
    %c0_11 = arith.constant 0 : index
    %7 = vector.load %arg2[%c1_9, %c0_10, %c0_11] : memref<3x64x256xbf16, #tpu.memory_space<vmem>>, vector<1x64x256xbf16>
    %8 = vector.shape_cast %7 : vector<1x64x256xbf16> to vector<64x256xbf16>
    %cst_12 = arith.constant dense<0.000000e+00> : vector<16x256xf32>
    %9 = tpu.matmul %6, %8, %cst_12 {dimension_numbers = #tpu.dot_dimension_numbers<[1], [0], [0], [1], [0, 0, 1, 1], [], []>} : vector<16x64xbf16>, vector<64x256xbf16>, vector<16x256xf32> -> vector<16x256xf32>
    %10 = arith.addf %4, %9 : vector<16x256xf32>
    %c0_13 = arith.constant 0 : index
    %c2 = arith.constant 2 : index
    %c0_14 = arith.constant 0 : index
    %c0_15 = arith.constant 0 : index
    %11 = vector.load %arg1[%c0_13, %c2, %c0_14, %c0_15] : memref<1x3x16x64xbf16, #tpu.memory_space<vmem>>, vector<1x1x16x64xbf16>
    %12 = vector.shape_cast %11 : vector<1x1x16x64xbf16> to vector<16x64xbf16>
    %c2_16 = arith.constant 2 : index
    %c0_17 = arith.constant 0 : index
    %c0_18 = arith.constant 0 : index
    %13 = vector.load %arg2[%c2_16, %c0_17, %c0_18] : memref<3x64x256xbf16, #tpu.memory_space<vmem>>, vector<1x64x256xbf16>
    %14 = vector.shape_cast %13 : vector<1x64x256xbf16> to vector<64x256xbf16>
    %cst_19 = arith.constant dense<0.000000e+00> : vector<16x256xf32>
    %15 = tpu.matmul %12, %14, %cst_19 {dimension_numbers = #tpu.dot_dimension_numbers<[1], [0], [0], [1], [0, 0, 1, 1], [], []>} : vector<16x64xbf16>, vector<64x256xbf16>, vector<16x256xf32> -> vector<16x256xf32>
    %16 = arith.addf %10, %15 : vector<16x256xf32>
    %c0_20 = arith.constant 0 : index
    %c0_21 = arith.constant 0 : index
    %17 = vector.load %arg3[%c0_20, %c0_21] : memref<1x256xf32, #tpu.memory_space<vmem>>, vector<1x256xf32>
    %18 = vector.broadcast %17 : vector<1x256xf32> to vector<16x256xf32>
    %19 = arith.addf %16, %18 : vector<16x256xf32>
    %c0_22 = arith.constant 0 : index
    %c0_23 = arith.constant 0 : index
    %c0_24 = arith.constant 0 : index
    %20 = vector.load %arg4[%c0_22, %c0_23, %c0_24] : memref<1x16x256xf32, #tpu.memory_space<vmem>>, vector<1x16x256xf32>
    %21 = vector.shape_cast %20 : vector<1x16x256xf32> to vector<16x256xf32>
    %22 = vector.shape_cast %19 : vector<16x256xf32> to vector<1x16x256xf32>
    tpu.vector_store %arg4[%c0_22, %c0_23, %c0_24], %22 {strides = array<i32>} : memref<1x16x256xf32, #tpu.memory_space<vmem>>, vector<1x16x256xf32>,
    return
  }
  func.func @transform_0(%arg0: i32) -> (i32, i32, i32, i32) {
    %c0_i32 = arith.constant 0 : i32
    %c0_i32_0 = arith.constant 0 : i32
    %c0_i32_1 = arith.constant 0 : i32
    %c0_i32_2 = arith.constant 0 : i32
    return %arg0, %c0_i32, %c0_i32_0, %c0_i32_1 : i32, i32, i32, i32
  }
  func.func @transform_1(%arg0: i32) -> (i32, i32, i32) {
    %c0_i32 = arith.constant 0 : i32
    %c0_i32_0 = arith.constant 0 : i32
    %c0_i32_1 = arith.constant 0 : i32
    %c0_i32_2 = arith.constant 0 : i32
    return %c0_i32, %c0_i32_0, %c0_i32_1 : i32, i32, i32
  }
  func.func @transform_2(%arg0: i32) -> (i32, i32) {
    %c0_i32 = arith.constant 0 : i32
    %c0_i32_0 = arith.constant 0 : i32
    %c0_i32_1 = arith.constant 0 : i32
    return %c0_i32, %c0_i32_0 : i32, i32
  }
  func.func @transform_3(%arg0: i32) -> (i32, i32, i32) {
    %c0_i32 = arith.constant 0 : i32
    %c0_i32_0 = arith.constant 0 : i32
    %c0_i32_1 = arith.constant 0 : i32
    return %arg0, %c0_i32, %c0_i32_0 : i32, i32, i32
  }
}

</mosaic_0001>

<llo_original>
// kernel: tile.8
$region0: #{tile.8}
  #allocation0 [shape = 's32[1]{0}', space=sflag, size = 0x4, scoped, tag = 'scoped memory for tile.8']
  %s0 = inlined_call_operand.vmem [shape: f32[4], index: 0, kind: input, shape index: {}]
  %s1 = inlined_call_operand.vmem [shape: f32[64,4], index: 1, kind: output, shape index: {}]
  // Predicated region
  $region2: #{tile.8} parent=0 // pred_check
    _
  $region3: #{tile.8} parent=0 // pred_check_branch
    %3 = sbr.rel (0) target = $region5
  $region4: #{tile.8} parent=0 // pred_region
    _
  $region5: #{tile.8} parent=0 // pred_fallthru
    _
  %v4 = vld [vmem:[%s0] ss:$0 sm:$0xff]
  %5 = vst [vmem:[%s1] sm:$0xff] %v4
  %s6 = scalar_lea.vmem %s1, 8
  %7 = vst [vmem:[%s6] sm:$0xff] %v4
  %s8 = scalar_lea.vmem %s1, 16
  %9 = vst [vmem:[%s8] sm:$0xff] %v4
  %s10 = scalar_lea.vmem %s1, 24
  %11 = vst [vmem:[%s10] sm:$0xff] %v4
  %s12 = scalar_lea.vmem %s1, 32
  %13 = vst [vmem:[%s12] sm:$0xff] %v4
  %s14 = scalar_lea.vmem %s1, 40
  %15 = vst [vmem:[%s14] sm:$0xff] %v4
  %s16 = scalar_lea.vmem %s1, 48
  %17 = vst [vmem:[%s16] sm:$0xff] %v4
  %s18 = scalar_lea.vmem %s1, 56
  %19 = vst [vmem:[%s18] sm:$0xff] %v4

// kernel: tile.9
$region0: #{tile.9}
  %s0 = inlined_call_operand.vmem [shape: f32[64,4], index: 0, kind: input, shape index: {}]
  %s1 = inlined_call_operand.vmem [shape: f32[1,256], index: 1, kind: output, shape index: {}]
  $region1: #{tile.9} parent=0
    #allocation0 [shape = 'u8[8192]{0}', space=vmem, size = 0x2000, scoped, tag = 'scoped mem for output reshape']
    %v2 = vld [vmem:[%s0] sm:$0x1]
    %s3 = scalar_lea.vmem %s0, 31
    %v4 = vld [vmem:[%s3] sm:$0x2]
    %vm5 = vcmask 1041409
    %v6 = vsel %vm5, %v4, %v2
    %vm7 = vcmask 31744
    %8 = vst.msk [vmem:[#allocation0] ss:$8 sm:$0x3] %vm7, %v6
    %s9 = scalar_lea.vmem %s0, 31
    %v10 = vld [vmem:[%s9] sm:$0x1]
    %s11 = scalar_lea.vmem %s0, 62
    %v12 = vld [vmem:[%s11] sm:$0x2]
    %vm13 = vcmask 1041409
    %v14 = vsel %vm13, %v12, %v10
    %15 = vrot.lane.b32.xlu0 %v14, 124
    %v16 = vpop.permute.xlu0 %15
    %vm17 = vcmask 1048544
    %18 = vst.msk [vmem:[#allocation0] ss:$8 sm:$0x3] %vm17, %v16
    %s19 = scalar_lea.vmem %s0, 30
    %v20 = vld [vmem:[%s19] sm:$0x1]
    %s21 = scalar_lea.vmem %s0, 61
    %v22 = vld [vmem:[%s21] sm:$0x2]
    %vm23 = vcmask 1041409
    %v24 = vsel %vm23, %v22, %v20
    %25 = vrot.lane.b32.xlu0 %v24, 120
    %v26 = vpop.permute.xlu0 %25
    %vm27 = vcmask 1015744
    %28 = vst.msk [vmem:[#allocation0] ss:$8 sm:$0x3] %vm27, %v26
    %s29 = scalar_lea.vmem %s0, 29
    %v30 = vld [vmem:[%s29] sm:$0x1]
    %s31 = scalar_lea.vmem %s0, 60
    %v32 = vld [vmem:[%s31] sm:$0x2]
    %vm33 = vcmask 1041409
    %v34 = vsel %vm33, %v32, %v30
    %35 = vrot.lane.b32.xlu0 %v34, 116
    %v36 = vpop.permute.xlu0 %35
    %vm37 = vcmask 982944
    %38 = vst.msk [vmem:[#allocation0] ss:$8 sm:$0x3] %vm37, %v36
    %s39 = scalar_lea.vmem %s0, 28
    %v40 = vld [vmem:[%s39] sm:$0x1]
    %s41 = scalar_lea.vmem %s0, 59
    %v42 = vld [vmem:[%s41] sm:$0x2]
    %vm43 = vcmask 1041409
    %v44 = vsel %vm43, %v42, %v40
    %45 = vrot.lane.b32.xlu0 %v44, 112
    %v46 = vpop.permute.xlu0 %45
    %vm47 = vcmask 950144
    %48 = vst.msk [vmem:[#allocation0] ss:$8 sm:$0x3] %vm47, %v46
    %s49 = scalar_lea.vmem %s0, 27
    %v50 = vld [vmem:[%s49] sm:$0x1]
    %s51 = scalar_lea.vmem %s0, 58
    %v52 = vld [vmem:[%s51] sm:$0x2]
    %vm53 = vcmask 1041409
    %v54 = vsel %vm53, %v52, %v50
    %55 = vrot.lane.b32.xlu0 %v54, 108
    %v56 = vpop.permute.xlu0 %55
    %vm57 = vcmask 917344
    %58 = vst.msk [vmem:[#allocation0] ss:$8 sm:$0x3] %vm57, %v56
    %s59 = scalar_lea.vmem %s0, 26
    %v60 = vld [vmem:[%s59] sm:$0x1]
    %s61 = scalar_lea.vmem %s0, 57
    %v62 = vld [vmem:[%s61] sm:$0x2]
    %vm63 = vcmask 1041409
    %v64 = vsel %vm63, %v62, %v60
    %65 = vrot.lane.b32.xlu0 %v64, 104
    %v66 = vpop.permute.xlu0 %65
    %vm67 = vcmask 884544
    %68 = vst.msk [vmem:[#allocation0] ss:$8 sm:$0x3] %vm67, %v66
    %s69 = scalar_lea.vmem %s0, 25
    %v70 = vld [vmem:[%s69] sm:$0x1]
    %s71 = scalar_lea.vmem %s0, 56
    %v72 = vld [vmem:[%s71] sm:$0x2]
    %vm73 = vcmask 1041409
    %v74 = vsel %vm73, %v72, %v70
    %75 = vrot.lane.b32.xlu0 %v74, 100
    %v76 = vpop.permute.xlu0 %75
    %vm77 = vcmask 851744
    %78 = vst.msk [vmem:[#allocation0] ss:$8 sm:$0x3] %vm77, %v76
    %s79 = scalar_lea.vmem %s0, 24
    %v80 = vld [vmem:[%s79] sm:$0x1]
    %s81 = scalar_lea.vmem %s0, 55
    %v82 = vld [vmem:[%s81] sm:$0x2]
    %vm83 = vcmask 1041409
    %v84 = vsel %vm83, %v82, %v80
    %85 = vrot.lane.b32.xlu0 %v84, 96
    %v86 = vpop.permute.xlu0 %85
    %vm87 = vcmask 818944
    %88 = vst.msk [vmem:[#allocation0] ss:$8 sm:$0x3] %vm87, %v86
    %s89 = scalar_lea.vmem %s0, 23
    %v90 = vld [vmem:[%s89] sm:$0x1]
    %s91 = scalar_lea.vmem %s0, 54
    %v92 = vld [vmem:[%s91] sm:$0x2]
    %vm93 = vcmask 1041409
    %v94 = vsel %vm93, %v92, %v90
    %95 = vrot.lane.b32.xlu0 %v94, 92
    %v96 = vpop.permute.xlu0 %95
    %vm97 = vcmask 786144
    %98 = vst.msk [vmem:[#allocation0] ss:$8 sm:$0x3] %vm97, %v96
    %s99 = scalar_lea.vmem %s0, 22
    %v100 = vld [vmem:[%s99] sm:$0x1]
    %s101 = scalar_lea.vmem %s0, 53
    %v102 = vld [vmem:[%s101] sm:$0x2]
    %vm103 = vcmask 1041409
    %v104 = vsel %vm103, %v102, %v100
    %105 = vrot.lane.b32.xlu0 %v104, 88
    %v106 = vpop.permute.xlu0 %105
    %vm107 = vcmask 753344
    %108 = vst.msk [vmem:[#allocation0] ss:$8 sm:$0x3] %vm107, %v106
    %s109 = scalar_lea.vmem %s0, 21
    %v110 = vld [vmem:[%s109] sm:$0x1]
    %s111 = scalar_lea.vmem %s0, 52
    %v112 = vld [vmem:[%s111] sm:$0x2]
    %vm113 = vcmask 1041409
    %v114 = vsel %vm113, %v112, %v110
    %115 = vrot.lane.b32.xlu0 %v114, 84
    %v116 = vpop.permute.xlu0 %115
    %vm117 = vcmask 720544
    %118 = vst.msk [vmem:[#allocation0] ss:$8 sm:$0x3] %vm117, %v116
    %s119 = scalar_lea.vmem %s0, 20
    %v120 = vld [vmem:[%s119] sm:$0x1]
    %s121 = scalar_lea.vmem %s0, 51
    %v122 = vld [vmem:[%s121] sm:$0x2]
    %vm123 = vcmask 1041409
    %v124 = vsel %vm123, %v122, %v120
    %125 = vrot.lane.b32.xlu0 %v124, 80
    %v126 = vpop.permute.xlu0 %125
    %vm127 = vcmask 687744
    %128 = vst.msk [vmem:[#allocation0] ss:$8 sm:$0x3] %vm127, %v126
    %s129 = scalar_lea.vmem %s0, 19
    %v130 = vld [vmem:[%s129] sm:$0x1]
    %s131 = scalar_lea.vmem %s0, 50
    %v132 = vld [vmem:[%s131] sm:$0x2]
    %vm133 = vcmask 1041409
    %v134 = vsel %vm133, %v132, %v130
    %135 = vrot.lane.b32.xlu0 %v134, 76
    %v136 = vpop.permute.xlu0 %135
    %vm137 = vcmask 654944
    %138 = vst.msk [vmem:[#allocation0] ss:$8 sm:$0x3] %vm137, %v136
    %s139 = scalar_lea.vmem %s0, 18
    %v140 = vld [vmem:[%s139] sm:$0x1]
    %s141 = scalar_lea.vmem %s0, 49
    %v142 = vld [vmem:[%s141] sm:$0x2]
    %vm143 = vcmask 1041409
    %v144 = vsel %vm143, %v142, %v140
    %145 = vrot.lane.b32.xlu0 %v144, 72
    %v146 = vpop.permute.xlu0 %145
    %vm147 = vcmask 622144
    %148 = vst.msk [vmem:[#allocation0] ss:$8 sm:$0x3] %vm147, %v146
    %s149 = scalar_lea.vmem %s0, 17
    %v150 = vld [vmem:[%s149] sm:$0x1]
    %s151 = scalar_lea.vmem %s0, 48
    %v152 = vld [vmem:[%s151] sm:$0x2]
    %vm153 = vcmask 1041409
    %v154 = vsel %vm153, %v152, %v150
    %155 = vrot.lane.b32.xlu0 %v154, 68
    %v156 = vpop.permute.xlu0 %155
    %vm157 = vcmask 589344
    %158 = vst.msk [vmem:[#allocation0] ss:$8 sm:$0x3] %vm157, %v156
    %s159 = scalar_lea.vmem %s0, 16
    %v160 = vld [vmem:[%s159] sm:$0x1]
    %s161 = scalar_lea.vmem %s0, 47
    %v162 = vld [vmem:[%s161] sm:$0x2]
    %vm163 = vcmask 1041409
    %v164 = vsel %vm163, %v162, %v160
    %165 = vrot.lane.b32.xlu0 %v164, 64
    %v166 = vpop.permute.xlu0 %165
    %vm167 = vcmask 556544
    %168 = vst.msk [vmem:[#allocation0] ss:$8 sm:$0x3] %vm167, %v166
    %s169 = scalar_lea.vmem %s0, 15
    %v170 = vld [vmem:[%s169] sm:$0x1]
    %s171 = scalar_lea.vmem %s0, 46
    %v172 = vld [vmem:[%s171] sm:$0x2]
    %vm173 = vcmask 1041409
    %v174 = vsel %vm173, %v172, %v170
    %175 = vrot.lane.b32.xlu0 %v174, 60
    %v176 = vpop.permute.xlu0 %175
    %vm177 = vcmask 523744
    %178 = vst.msk [vmem:[#allocation0] ss:$8 sm:$0x3] %vm177, %v176
    %s179 = scalar_lea.vmem %s0, 14
    %v180 = vld [vmem:[%s179] sm:$0x1]
    %s181 = scalar_lea.vmem %s0, 45
    %v182 = vld [vmem:[%s181] sm:$0x2]
    %vm183 = vcmask 1041409
    %v184 = vsel %vm183, %v182, %v180
    %185 = vrot.lane.b32.xlu0 %v184, 56
    %v186 = vpop.permute.xlu0 %185
    %vm187 = vcmask 490944
    %188 = vst.msk [vmem:[#allocation0] ss:$8 sm:$0x3] %vm187, %v186
    %s189 = scalar_lea.vmem %s0, 13
    %v190 = vld [vmem:[%s189] sm:$0x1]
    %s191 = scalar_lea.vmem %s0, 44
    %v192 = vld [vmem:[%s191] sm:$0x2]
    %vm193 = vcmask 1041409
    %v194 = vsel %vm193, %v192, %v190
    %195 = vrot.lane.b32.xlu0 %v194, 52
    %v196 = vpop.permute.xlu0 %195
    %vm197 = vcmask 458144
    %198 = vst.msk [vmem:[#allocation0] ss:$8 sm:$0x3] %vm197, %v196
    %s199 = scalar_lea.vmem %s0, 12
    %v200 = vld [vmem:[%s199] sm:$0x1]
    %s201 = scalar_lea.vmem %s0, 43
    %v202 = vld [vmem:[%s201] sm:$0x2]
    %vm203 = vcmask 1041409
    %v204 = vsel %vm203, %v202, %v200
    %205 = vrot.lane.b32.xlu0 %v204, 48
    %v206 = vpop.permute.xlu0 %205
    %vm207 = vcmask 425344
    %208 = vst.msk [vmem:[#allocation0] ss:$8 sm:$0x3] %vm207, %v206
    %s209 = scalar_lea.vmem %s0, 11
    %v210 = vld [vmem:[%s209] sm:$0x1]
    %s211 = scalar_lea.vmem %s0, 42
    %v212 = vld [vmem:[%s211] sm:$0x2]
    %vm213 = vcmask 1041409
    %v214 = vsel %vm213, %v212, %v210
    %215 = vrot.lane.b32.xlu0 %v214, 44
    %v216 = vpop.permute.xlu0 %215
    %vm217 = vcmask 392544
    %218 = vst.msk [vmem:[#allocation0] ss:$8 sm:$0x3] %vm217, %v216
    %s219 = scalar_lea.vmem %s0, 10
    %v220 = vld [vmem:[%s219] sm:$0x1]
    %s221 = scalar_lea.vmem %s0, 41
    %v222 = vld [vmem:[%s221] sm:$0x2]
    %vm223 = vcmask 1041409
    %v224 = vsel %vm223, %v222, %v220
    %225 = vrot.lane.b32.xlu0 %v224, 40
    %v226 = vpop.permute.xlu0 %225
    %vm227 = vcmask 359744
    %228 = vst.msk [vmem:[#allocation0] ss:$8 sm:$0x3] %vm227, %v226
    %s229 = scalar_lea.vmem %s0, 9
    %v230 = vld [vmem:[%s229] sm:$0x1]
    %s231 = scalar_lea.vmem %s0, 40
    %v232 = vld [vmem:[%s231] sm:$0x2]
    %vm233 = vcmask 1041409
    %v234 = vsel %vm233, %v232, %v230
    %235 = vrot.lane.b32.xlu0 %v234, 36
    %v236 = vpop.permute.xlu0 %235
    %vm237 = vcmask 326944
    %238 = vst.msk [vmem:[#allocation0] ss:$8 sm:$0x3] %vm237, %v236
    %s239 = scalar_lea.vmem %s0, 8
    %v240 = vld [vmem:[%s239] sm:$0x1]
    %s241 = scalar_lea.vmem %s0, 39
    %v242 = vld [vmem:[%s241] sm:$0x2]
    %vm243 = vcmask 1041409
    %v244 = vsel %vm243, %v242, %v240
    %245 = vrot.lane.b32.xlu0 %v244, 32
    %v246 = vpop.permute.xlu0 %245
    %vm247 = vcmask 294144
    %248 = vst.msk [vmem:[#allocation0] ss:$8 sm:$0x3] %vm247, %v246
    %s249 = scalar_lea.vmem %s0, 7
    %v250 = vld [vmem:[%s249] sm:$0x1]
    %s251 = scalar_lea.vmem %s0, 38
    %v252 = vld [vmem:[%s251] sm:$0x2]
    %vm253 = vcmask 1041409
    %v254 = vsel %vm253, %v252, %v250
    %255 = vrot.lane.b32.xlu0 %v254, 28
    %v256 = vpop.permute.xlu0 %255
    %vm257 = vcmask 261344
    %258 = vst.msk [vmem:[#allocation0] ss:$8 sm:$0x3] %vm257, %v256
    %s259 = scalar_lea.vmem %s0, 6
    %v260 = vld [vmem:[%s259] sm:$0x1]
    %s261 = scalar_lea.vmem %s0, 37
    %v262 = vld [vmem:[%s261] sm:$0x2]
    %vm263 = vcmask 1041409
    %v264 = vsel %vm263, %v262, %v260
    %265 = vrot.lane.b32.xlu0 %v264, 24
    %v266 = vpop.permute.xlu0 %265
    %vm267 = vcmask 228544
    %268 = vst.msk [vmem:[#allocation0] ss:$8 sm:$0x3] %vm267, %v266
    %s269 = scalar_lea.vmem %s0, 5
    %v270 = vld [vmem:[%s269] sm:$0x1]
    %s271 = scalar_lea.vmem %s0, 36
    %v272 = vld [vmem:[%s271] sm:$0x2]
    %vm273 = vcmask 1041409
    %v274 = vsel %vm273, %v272, %v270
    %275 = vrot.lane.b32.xlu0 %v274, 20
    %v276 = vpop.permute.xlu0 %275
    %vm277 = vcmask 195744
    %278 = vst.msk [vmem:[#allocation0] ss:$8 sm:$0x3] %vm277, %v276
    %s279 = scalar_lea.vmem %s0, 4
    %v280 = vld [vmem:[%s279] sm:$0x1]
    %s281 = scalar_lea.vmem %s0, 35
    %v282 = vld [vmem:[%s281] sm:$0x2]
    %vm283 = vcmask 1041409
    %v284 = vsel %vm283, %v282, %v280
    %285 = vrot.lane.b32.xlu0 %v284, 16
    %v286 = vpop.permute.xlu0 %285
    %vm287 = vcmask 162944
    %288 = vst.msk [vmem:[#allocation0] ss:$8 sm:$0x3] %vm287, %v286
    %s289 = scalar_lea.vmem %s0, 3
    %v290 = vld [vmem:[%s289] sm:$0x1]
    %s291 = scalar_lea.vmem %s0, 34
    %v292 = vld [vmem:[%s291] sm:$0x2]
    %vm293 = vcmask 1041409
    %v294 = vsel %vm293, %v292, %v290
    %295 = vrot.lane.b32.xlu0 %v294, 12
    %v296 = vpop.permute.xlu0 %295
    %vm297 = vcmask 130144
    %298 = vst.msk [vmem:[#allocation0] ss:$8 sm:$0x3] %vm297, %v296
    %s299 = scalar_lea.vmem %s0, 2
    %v300 = vld [vmem:[%s299] sm:$0x1]
    %s301 = scalar_lea.vmem %s0, 33
    %v302 = vld [vmem:[%s301] sm:$0x2]
    %vm303 = vcmask 1041409
    %v304 = vsel %vm303, %v302, %v300
    %305 = vrot.lane.b32.xlu0 %v304, 8
    %v306 = vpop.permute.xlu0 %305
    %vm307 = vcmask 97344
    %308 = vst.msk [vmem:[#allocation0] ss:$8 sm:$0x3] %vm307, %v306
    %s309 = scalar_lea.vmem %s0, 1
    %v310 = vld [vmem:[%s309] sm:$0x1]
    %s311 = scalar_lea.vmem %s0, 32
    %v312 = vld [vmem:[%s311] sm:$0x2]
    %vm313 = vcmask 1041409
    %v314 = vsel %vm313, %v312, %v310
    %315 = vrot.lane.b32.xlu0 %v314, 4
    %v316 = vpop.permute.xlu0 %315
    %vm317 = vcmask 64544
    %318 = vst.msk [vmem:[#allocation0] ss:$8 sm:$0x3] %vm317, %v316
    %s320 = sshllo.u32 0, 1
    %v322 = vld [vmem:[#allocation0] sm:%s320]
    %s323 = sshllo.u32 0, 1
    %324 = vst [vmem:[%s1] sm:%s323] %v322
    %s325 = scalar_lea.vmem [#allocation0], 8
    %v326 = vld [vmem:[%s325] sm:%s320]
    %s327 = sshllo.u32 0, 1
    %s328 = scalar_lea.vmem %s1, 1
    %329 = vst [vmem:[%s328] sm:%s327] %v326

// kernel: upsample_forward.1
$region0: #{upsample_forward.1}
  #allocation0 [shape = 'u32[]', space=smem, size = 0x4, offset = 0x4, fixed_abs, tag = 'smem constant byte address 0x4 - core index']
  #allocation1 [shape = 'u32[144,128]{1,0:T(1,128)}', space=vmem, size = 0x12000, scoped, tag = 'internal scratch']
  %s0 = inlined_call_operand.vmem [shape: bf16[2,3,16,64], index: 0, kind: input, shape index: {}]
  %s1 = inlined_call_operand.vmem [shape: bf16[3,64,256], index: 1, kind: input, shape index: {}]
  %s2 = inlined_call_operand.vmem [shape: f32[1,256], index: 2, kind: input, shape index: {}]
  %s3 = inlined_call_operand.vmem [shape: f32[2,16,256], index: 3, kind: output, shape index: {}]
  %s4 = sld [smem:[#allocation0]]
  $region45: #{upsample_forward.1} parent=0
    _
  %s6 = ssub.s32 1, %s4
  %s7 = scalar_select 0, %s6, %s4
  loop: start=0, step=1, limit=4
  $region2: #{upsample_forward.1} parent=0 // loop_pre_header
    _
  $region3: #{upsample_forward.1} parent=0 // loop_header
    %s9 = sphi 0, %s13
    %p10 = scmp.ge.s32.totalorder %s9, 4
    %s19 = sphi 0, %s21
    %s22 = sphi 0, %s19
    %s23 = sphi 0, %s22
    %s39 = sphi 0, %s23
    %s43 = sphi 0, %s43
    %s45 = sphi 0, %s43
    %s46 = sphi 0, %s45
    %s60 = sphi 0, %s46
    %s64 = sphi 0, %s64
    %s66 = sphi 0, %s64
    %s67 = sphi 0, %s66
    %s81 = sphi 0, %s67
    %s87 = sphi 0, %s89
    %s90 = sphi 0, %s87
    %s91 = sphi 0, %s90
    %s107 = sphi 0, %s91
  $region4: #{upsample_forward.1} parent=0 // loop_header_branch
    %12 = sbr.rel (%p10) target = $region8
  $region5: #{upsample_forward.1} parent=0 // loop_body
    %s14 = ssub.s32 %s9, 1
    %s15 = ssub.s32 %s9, 2
    %s16 = sadd.s32 %s9, 1
    %s17 = ssub.s32 %s9, %s16
    %p18 = scmp.eq.s32.totalorder %s17, 0
    %s20 = sadd.s32 %s19, 1
    %s21 = scalar_select %p18, %s19, %s20
    %p24 = pneg %p18
    %p25 = scmp.eq.s32.totalorder %s9, 1
    %p26 = por %p24, %p25
    %p27 = scmp.ne.s32.totalorder %s19, %s22
    %p28 = scmp.eq.s32.totalorder %s9, 0
    %p29 = por %p27, %p28
    %p30 = scmp.ne.s32.totalorder %s19, %s22
    %p31 = scmp.eq.s32.totalorder %s14, 1
    %p32 = por %p30, %p31
    %p33 = scmp.ne.s32.totalorder %s22, %s23
    %p34 = scmp.eq.s32.totalorder %s14, 0
    %p35 = por %p33, %p34
    %p36 = scmp.ne.s32.totalorder %s22, %s23
    %p37 = scmp.eq.s32.totalorder %s15, 1
    %p38 = por %p36, %p37
    %p40 = scmp.ne.s32.totalorder %s23, %s39
    %p41 = scmp.eq.s32.totalorder %s15, 0
    %p42 = por %p40, %p41
    %s44 = sadd.s32 %s43, 1
    %p47 = scmp.eq.s32.totalorder %s9, 1
    %p48 = scmp.ne.s32.totalorder %s43, %s45
    %p49 = scmp.eq.s32.totalorder %s9, 0
    %p50 = por %p48, %p49
    %p51 = scmp.ne.s32.totalorder %s43, %s45
    %p52 = scmp.eq.s32.totalorder %s14, 1
    %p53 = por %p51, %p52
    %p54 = scmp.ne.s32.totalorder %s45, %s46
    %p55 = scmp.eq.s32.totalorder %s14, 0
    %p56 = por %p54, %p55
    %p57 = scmp.ne.s32.totalorder %s45, %s46
    %p58 = scmp.eq.s32.totalorder %s15, 1
    %p59 = por %p57, %p58
    %p61 = scmp.ne.s32.totalorder %s46, %s60
    %p62 = scmp.eq.s32.totalorder %s15, 0
    %p63 = por %p61, %p62
    %s65 = sadd.s32 %s64, 1
    %p68 = scmp.eq.s32.totalorder %s9, 1
    %p69 = scmp.ne.s32.totalorder %s64, %s66
    %p70 = scmp.eq.s32.totalorder %s9, 0
    %p71 = por %p69, %p70
    %p72 = scmp.ne.s32.totalorder %s64, %s66
    %p73 = scmp.eq.s32.totalorder %s14, 1
    %p74 = por %p72, %p73
    %p75 = scmp.ne.s32.totalorder %s66, %s67
    %p76 = scmp.eq.s32.totalorder %s14, 0
    %p77 = por %p75, %p76
    %p78 = scmp.ne.s32.totalorder %s66, %s67
    %p79 = scmp.eq.s32.totalorder %s15, 1
    %p80 = por %p78, %p79
    %p82 = scmp.ne.s32.totalorder %s67, %s81
    %p83 = scmp.eq.s32.totalorder %s15, 0
    %p84 = por %p82, %p83
    %s85 = ssub.s32 %s9, %s16
    %p86 = scmp.eq.s32.totalorder %s85, 0
    %s88 = sadd.s32 %s87, 1
    %s89 = scalar_select %p86, %s87, %s88
    %p92 = pneg %p86
    %p93 = scmp.eq.s32.totalorder %s9, 1
    %p94 = por %p92, %p93
    %p95 = scmp.ne.s32.totalorder %s87, %s90
    %p96 = scmp.eq.s32.totalorder %s9, 0
    %p97 = por %p95, %p96
    %p98 = scmp.ne.s32.totalorder %s87, %s90
    %p99 = scmp.eq.s32.totalorder %s14, 1
    %p100 = por %p98, %p99
    %p101 = scmp.ne.s32.totalorder %s90, %s91
    %p102 = scmp.eq.s32.totalorder %s14, 0
    %p103 = por %p101, %p102
    %p104 = scmp.ne.s32.totalorder %s90, %s91
    %p105 = scmp.eq.s32.totalorder %s15, 1
    %p106 = por %p104, %p105
    %p108 = scmp.ne.s32.totalorder %s91, %s107
    %p109 = scmp.eq.s32.totalorder %s15, 0
    %p110 = por %p108, %p109
    %p111 = scmp.le.s32.totalorder 1, %s9
    %p112 = scmp.lt.s32.totalorder %s9, 3
    %p113 = pnand %p111, %p112
    %p114 = pneg %p113
    // Predicated region
    $region9: #{upsample_forward.1} parent=5 // pred_check
      _
    $region10: #{upsample_forward.1} parent=5 // pred_check_branch
      %116 = sbr.rel (%p113) target = $region12
    $region11: #{upsample_forward.1} parent=5 // pred_region
      %s117 = ssub.s32 %s9, 1
      // Predicated region
      $region13: #{upsample_forward.1} parent=11 // pred_check
        %p118 = pneg %p56
      $region14: #{upsample_forward.1} parent=11 // pred_check_branch
        %120 = sbr.rel (%p118) target = $region16
      $region15: #{upsample_forward.1} parent=11 // pred_region
        _
      $region16: #{upsample_forward.1} parent=11 // pred_fallthru
        _
      // Predicated region
      $region17: #{upsample_forward.1} parent=11 // pred_check
        %p121 = pneg %p77
      $region18: #{upsample_forward.1} parent=11 // pred_check_branch
        %123 = sbr.rel (%p121) target = $region20
      $region19: #{upsample_forward.1} parent=11 // pred_region
        _
      $region20: #{upsample_forward.1} parent=11 // pred_fallthru
        _
    $region12: #{upsample_forward.1} parent=5 // pred_fallthru
      _
    %p124 = scmp.lt.s32.totalorder %s9, 2
    // Predicated region
    $region21: #{upsample_forward.1} parent=5 // pred_check
      %p125 = pneg %p124
    $region22: #{upsample_forward.1} parent=5 // pred_check_branch
      %127 = sbr.rel (%p125) target = $region24
    $region23: #{upsample_forward.1} parent=5 // pred_region
      // Predicated region
      $region25: #{upsample_forward.1} parent=23 // pred_check
        %p128 = pneg %p29
      $region26: #{upsample_forward.1} parent=23 // pred_check_branch
        %130 = sbr.rel (%p128) target = $region28
      $region27: #{upsample_forward.1} parent=23 // pred_region
        %p131 = scmp.lt.s32.totalorder %s9, 1
        %s132 = scalar_select %p131, %s9, 1
        %s133 = smul.addr %s132, 6
        %s134 = smul.addr %s133, 4
        %s135 = scalar_lea.vmem %s0, %s134
      $region28: #{upsample_forward.1} parent=23 // pred_fallthru
        _
    $region24: #{upsample_forward.1} parent=5 // pred_fallthru
      _
    %p136 = scmp.le.s32.totalorder 1, %s9
    %p137 = scmp.lt.s32.totalorder %s9, 3
    %p138 = pnand %p136, %p137
    %p139 = pneg %p138
    // Predicated region
    $region29: #{upsample_forward.1} parent=5 // pred_check
      _
    $region30: #{upsample_forward.1} parent=5 // pred_check_branch
      %141 = sbr.rel (%p138) target = $region32
    $region31: #{upsample_forward.1} parent=5 // pred_region
      %s142 = ssub.s32 %s9, 1
      %p143 = scmp.lt.s32.totalorder %s14, 1
      %s144 = scalar_select %p143, %s14, 1
      %s145 = smul.addr %s144, 6
      %s146 = smul.addr %s145, 4
      %s147 = scalar_lea.vmem %s0, %s146
      %p148 = pneg %p35
      %p149 = pneg %p32
      %p150 = pneg %p56
      %p151 = pneg %p53
      %p152 = pneg %p77
      %p153 = pneg %p74
      %p154 = pneg %p103
      %p155 = pneg %p100
      %p156 = scmp.lt.s32.totalorder %s14, 1
      %s157 = scalar_select %p156, %s14, 1
      %s158 = smul.addr %s157, 4
      %s159 = smul.addr %s158, 8
      %s160 = scalar_lea.vmem %s3, %s159
      %p161 = scmp.lt.s32.totalorder %s14, 1
      %s162 = scalar_select %p161, %s14, 1
      %s163 = smul.addr %s162, 6
      %s164 = smul.addr %s163, 4
      %s165 = scalar_lea.vmem %s0, %s164
      %p166 = scmp.lt.s32.totalorder %s14, 1
      %s167 = scalar_select %p166, %s14, 1
      %s168 = smul.addr %s167, 4
      %s169 = smul.addr %s168, 8
      %s170 = scalar_lea.vmem %s3, %s169
      %v172 = vld [vmem:[%s165] sm:$0xf]
      %v173 = vld [vmem:[%s165 + $0x4] sm:$0xf]
      %v174 = vld [vmem:[%s1] sm:$0xff]
      %v175 = vld [vmem:[%s1 + $0x8] sm:$0xff]
      %v176 = vld [vmem:[%s1 + $0x10] sm:$0xff]
      %v177 = vld [vmem:[%s1 + $0x18] sm:$0xff]
      %v178 = vld [vmem:[%s1 + $0x20] sm:$0xff]
      %v179 = vld [vmem:[%s1 + $0x28] sm:$0xff]
      %v180 = vld [vmem:[%s1 + $0x30] sm:$0xff]
      %v181 = vld [vmem:[%s1 + $0x38] sm:$0xff]
      %s182 = scalar_lea.vmem %s165, 8
      %v183 = vld [vmem:[%s182] sm:$0xf]
      %v184 = vld [vmem:[%s182 + $0x4] sm:$0xf]
      %s185 = scalar_lea.vmem %s1, 64
      %v186 = vld [vmem:[%s185] sm:$0xff]
      %v187 = vld [vmem:[%s185 + $0x8] sm:$0xff]
      %v188 = vld [vmem:[%s185 + $0x10] sm:$0xff]
      %v189 = vld [vmem:[%s185 + $0x18] sm:$0xff]
      %v190 = vld [vmem:[%s185 + $0x20] sm:$0xff]
      %v191 = vld [vmem:[%s185 + $0x28] sm:$0xff]
      %v192 = vld [vmem:[%s185 + $0x30] sm:$0xff]
      %v193 = vld [vmem:[%s185 + $0x38] sm:$0xff]
      %v196 = vunpack.c.l.b16 %v183
      %v197 = vunpack.c.l.b16 %v184
      %v198 = vpack.c.b16 %v197, %v196
      %v207 = vunpack.c.l.b16 %v186
      %v208 = vunpack.c.h.b16 %v186
      %v209 = vunpack.c.l.b16 %v187
      %v210 = vunpack.c.h.b16 %v187
      %v211 = vunpack.c.l.b16 %v188
      %v212 = vunpack.c.h.b16 %v188
      %v213 = vunpack.c.l.b16 %v189
      %v214 = vunpack.c.h.b16 %v189
      %v215 = vunpack.c.l.b16 %v190
      %v216 = vunpack.c.h.b16 %v190
      %v217 = vunpack.c.l.b16 %v191
      %v218 = vunpack.c.h.b16 %v191
      %v219 = vunpack.c.l.b16 %v192
      %v220 = vunpack.c.h.b16 %v192
      %v221 = vunpack.c.l.b16 %v193
      %v222 = vunpack.c.h.b16 %v193
      %v223 = vpack.c.b16 %v209, %v207
      %v224 = vpack.c.b16 %v210, %v208
      %v225 = vpack.c.b16 %v213, %v211
      %v226 = vpack.c.b16 %v214, %v212
      %v227 = vpack.c.b16 %v217, %v215
      %v228 = vpack.c.b16 %v218, %v216
      %v229 = vpack.c.b16 %v221, %v219
      %v230 = vpack.c.b16 %v222, %v220
      %vm239 = vcmask 523264
      %v241 = vsel %vm239, %v198, 0
      %243 = vmatprep.subr.bf16.mxu0 %v224
      %244 = vmatpush1.bf16.msra.mxu0 %v223
      %245 = vmatprep.subr.bf16.mxu0 %v226
      %246 = vmatpush1.bf16.msra.mxu0 %v225
      %247 = vmatprep.subr.bf16.mxu0 %v228
      %248 = vmatpush1.bf16.msra.mxu0 %v227
      %249 = vmatprep.subr.bf16.mxu0 %v230
      %250 = vmatpush1.bf16.msra.mxu0 %v229
      %251 = vmatprep.subr.bf16.mxu0 0
      %252 = vmatpush1.bf16.msra.mxu0 0
      %253 = vmatprep.subr.bf16.mxu0 0
      %254 = vmatpush1.bf16.msra.mxu0 0
      %255 = vmatprep.subr.bf16.mxu0 0
      %256 = vmatpush1.bf16.msra.mxu0 0
      %257 = vmatprep.subr.bf16.mxu0 0
      %258 = vmatpush1.bf16.msra.mxu0 0
      %259 = vmatprep.subr.bf16.mxu0 0
      %260 = vmatpush1.bf16.msra.mxu0 0
      %261 = vmatprep.subr.bf16.mxu0 0
      %262 = vmatpush1.bf16.msra.mxu0 0
      %263 = vmatprep.subr.bf16.mxu0 0
      %264 = vmatpush1.bf16.msra.mxu0 0
      %265 = vmatprep.subr.bf16.mxu0 0
      %266 = vmatpush1.bf16.msra.mxu0 0
      %267 = vmatprep.subr.bf16.mxu0 0
      %268 = vmatpush1.bf16.msra.mxu0 0
      %269 = vmatprep.subr.bf16.mxu0 0
      %270 = vmatpush1.bf16.msra.mxu0 0
      %271 = vmatprep.subr.bf16.mxu0 0
      %272 = vmatpush1.bf16.msra.mxu0 0
      %273 = vmatprep.subr.bf16.mxu0 0
      %274 = vmatpush1.bf16.msra.mxu0 0
      %275 = vmatprep.mubr.bf16.mxu0 0
      %276 = vmatmul.mubr.bf16.gmra.mrb[0].mxu0 %v241
      %v277 = vpop.f32.mrb[0].mxu0
      %v278 = vadd.f32 0.0, %v277
      %v279 = vpop.f32.mrb[0].mxu0
      %v280 = vadd.f32 0.0, %v279
      %v281 = vpop.f32.mrb[0].mxu0
      %v282 = vadd.f32 0.0, %v281
      %v283 = vpop.f32.mrb[0].mxu0
      %v284 = vadd.f32 0.0, %v283
      %285 = vdwg.mxu0
      %v288 = vunpack.c.l.b16 %v172
      %v289 = vunpack.c.l.b16 %v173
      %v290 = vpack.c.b16 %v289, %v288
      %v299 = vunpack.c.l.b16 %v174
      %v300 = vunpack.c.h.b16 %v174
      %v301 = vunpack.c.l.b16 %v175
      %v302 = vunpack.c.h.b16 %v175
      %v303 = vunpack.c.l.b16 %v176
      %v304 = vunpack.c.h.b16 %v176
      %v305 = vunpack.c.l.b16 %v177
      %v306 = vunpack.c.h.b16 %v177
      %v307 = vunpack.c.l.b16 %v178
      %v308 = vunpack.c.h.b16 %v178
      %v309 = vunpack.c.l.b16 %v179
      %v310 = vunpack.c.h.b16 %v179
      %v311 = vunpack.c.l.b16 %v180
      %v312 = vunpack.c.h.b16 %v180
      %v313 = vunpack.c.l.b16 %v181
      %v314 = vunpack.c.h.b16 %v181
      %v315 = vpack.c.b16 %v301, %v299
      %v316 = vpack.c.b16 %v302, %v300
      %v317 = vpack.c.b16 %v305, %v303
      %v318 = vpack.c.b16 %v306, %v304
      %v319 = vpack.c.b16 %v309, %v307
      %v320 = vpack.c.b16 %v310, %v308
      %v321 = vpack.c.b16 %v313, %v311
      %v322 = vpack.c.b16 %v314, %v312
      %v332 = vsel %vm239, %v290, 0
      %334 = vmatprep.subr.bf16.mxu0 %v316
      %335 = vmatpush1.bf16.msra.mxu0 %v315
      %336 = vmatprep.subr.bf16.mxu0 %v318
      %337 = vmatpush1.bf16.msra.mxu0 %v317
      %338 = vmatprep.subr.bf16.mxu0 %v320
      %339 = vmatpush1.bf16.msra.mxu0 %v319
      %340 = vmatprep.subr.bf16.mxu0 %v322
      %341 = vmatpush1.bf16.msra.mxu0 %v321
      %342 = vmatprep.subr.bf16.mxu0 0
      %343 = vmatpush1.bf16.msra.mxu0 0
      %344 = vmatprep.subr.bf16.mxu0 0
      %345 = vmatpush1.bf16.msra.mxu0 0
      %346 = vmatprep.subr.bf16.mxu0 0
      %347 = vmatpush1.bf16.msra.mxu0 0
      %348 = vmatprep.subr.bf16.mxu0 0
      %349 = vmatpush1.bf16.msra.mxu0 0
      %350 = vmatprep.subr.bf16.mxu0 0
      %351 = vmatpush1.bf16.msra.mxu0 0
      %352 = vmatprep.subr.bf16.mxu0 0
      %353 = vmatpush1.bf16.msra.mxu0 0
      %354 = vmatprep.subr.bf16.mxu0 0
      %355 = vmatpush1.bf16.msra.mxu0 0
      %356 = vmatprep.subr.bf16.mxu0 0
      %357 = vmatpush1.bf16.msra.mxu0 0
      %358 = vmatprep.subr.bf16.mxu0 0
      %359 = vmatpush1.bf16.msra.mxu0 0
      %360 = vmatprep.subr.bf16.mxu0 0
      %361 = vmatpush1.bf16.msra.mxu0 0
      %362 = vmatprep.subr.bf16.mxu0 0
      %363 = vmatpush1.bf16.msra.mxu0 0
      %364 = vmatprep.subr.bf16.mxu0 0
      %365 = vmatpush1.bf16.msra.mxu0 0
      %366 = vmatprep.mubr.bf16.mxu0 0
      %367 = vmatmul.mubr.bf16.gmra.mrb[0].mxu0 %v332
      %v368 = vpop.f32.mrb[0].mxu0
      %v369 = vadd.f32 %v278, %v368
      %v370 = vpop.f32.mrb[0].mxu0
      %v371 = vadd.f32 %v280, %v370
      %v372 = vpop.f32.mrb[0].mxu0
      %v373 = vadd.f32 %v282, %v372
      %v374 = vpop.f32.mrb[0].mxu0
      %v375 = vadd.f32 %v284, %v374
      %376 = vdwg.mxu0
      %s377 = scalar_lea.vmem %s165, 16
      %v378 = vld [vmem:[%s377] sm:$0xf]
      %v379 = vld [vmem:[%s377 + $0x4] sm:$0xf]
      %s380 = scalar_lea.vmem %s1, 128
      %v381 = vld [vmem:[%s380] sm:$0xff]
      %v382 = vld [vmem:[%s380 + $0x8] sm:$0xff]
      %v383 = vld [vmem:[%s380 + $0x10] sm:$0xff]
      %v384 = vld [vmem:[%s380 + $0x18] sm:$0xff]
      %v385 = vld [vmem:[%s380 + $0x20] sm:$0xff]
      %v386 = vld [vmem:[%s380 + $0x28] sm:$0xff]
      %v387 = vld [vmem:[%s380 + $0x30] sm:$0xff]
      %v388 = vld [vmem:[%s380 + $0x38] sm:$0xff]
      %v391 = vunpack.c.l.b16 %v378
      %v392 = vunpack.c.l.b16 %v379
      %v393 = vpack.c.b16 %v392, %v391
      %v402 = vunpack.c.l.b16 %v381
      %v403 = vunpack.c.h.b16 %v381
      %v404 = vunpack.c.l.b16 %v382
      %v405 = vunpack.c.h.b16 %v382
      %v406 = vunpack.c.l.b16 %v383
      %v407 = vunpack.c.h.b16 %v383
      %v408 = vunpack.c.l.b16 %v384
      %v409 = vunpack.c.h.b16 %v384
      %v410 = vunpack.c.l.b16 %v385
      %v411 = vunpack.c.h.b16 %v385
      %v412 = vunpack.c.l.b16 %v386
      %v413 = vunpack.c.h.b16 %v386
      %v414 = vunpack.c.l.b16 %v387
      %v415 = vunpack.c.h.b16 %v387
      %v416 = vunpack.c.l.b16 %v388
      %v417 = vunpack.c.h.b16 %v388
      %v418 = vpack.c.b16 %v404, %v402
      %v419 = vpack.c.b16 %v405, %v403
      %v420 = vpack.c.b16 %v408, %v406
      %v421 = vpack.c.b16 %v409, %v407
      %v422 = vpack.c.b16 %v412, %v410
      %v423 = vpack.c.b16 %v413, %v411
      %v424 = vpack.c.b16 %v416, %v414
      %v425 = vpack.c.b16 %v417, %v415
      %v435 = vsel %vm239, %v393, 0
      %437 = vmatprep.subr.bf16.mxu0 %v419
      %438 = vmatpush1.bf16.msra.mxu0 %v418
      %439 = vmatprep.subr.bf16.mxu0 %v421
      %440 = vmatpush1.bf16.msra.mxu0 %v420
      %441 = vmatprep.subr.bf16.mxu0 %v423
      %442 = vmatpush1.bf16.msra.mxu0 %v422
      %443 = vmatprep.subr.bf16.mxu0 %v425
      %444 = vmatpush1.bf16.msra.mxu0 %v424
      %445 = vmatprep.subr.bf16.mxu0 0
      %446 = vmatpush1.bf16.msra.mxu0 0
      %447 = vmatprep.subr.bf16.mxu0 0
      %448 = vmatpush1.bf16.msra.mxu0 0
      %449 = vmatprep.subr.bf16.mxu0 0
      %450 = vmatpush1.bf16.msra.mxu0 0
      %451 = vmatprep.subr.bf16.mxu0 0
      %452 = vmatpush1.bf16.msra.mxu0 0
      %453 = vmatprep.subr.bf16.mxu0 0
      %454 = vmatpush1.bf16.msra.mxu0 0
      %455 = vmatprep.subr.bf16.mxu0 0
      %456 = vmatpush1.bf16.msra.mxu0 0
      %457 = vmatprep.subr.bf16.mxu0 0
      %458 = vmatpush1.bf16.msra.mxu0 0
      %459 = vmatprep.subr.bf16.mxu0 0
      %460 = vmatpush1.bf16.msra.mxu0 0
      %461 = vmatprep.subr.bf16.mxu0 0
      %462 = vmatpush1.bf16.msra.mxu0 0
      %463 = vmatprep.subr.bf16.mxu0 0
      %464 = vmatpush1.bf16.msra.mxu0 0
      %465 = vmatprep.subr.bf16.mxu0 0
      %466 = vmatpush1.bf16.msra.mxu0 0
      %467 = vmatprep.subr.bf16.mxu0 0
      %468 = vmatpush1.bf16.msra.mxu0 0
      %469 = vmatprep.mubr.bf16.mxu0 0
      %470 = vmatmul.mubr.bf16.gmra.mrb[0].mxu0 %v435
      %v471 = vpop.f32.mrb[0].mxu0
      %v472 = vadd.f32 0.0, %v471
      %v473 = vpop.f32.mrb[0].mxu0
      %v474 = vadd.f32 0.0, %v473
      %v475 = vpop.f32.mrb[0].mxu0
      %v476 = vadd.f32 0.0, %v475
      %v477 = vpop.f32.mrb[0].mxu0
      %v478 = vadd.f32 0.0, %v477
      %479 = vdwg.mxu0
      %v480 = vadd.f32 %v369, %v472
      %v481 = vadd.f32 %v371, %v474
      %v482 = vadd.f32 %v373, %v476
      %v483 = vadd.f32 %v375, %v478
      %v484 = vld [vmem:[%s2] sm:$0x3]
      %v486 = vlaneseq
      %v487 = vshrl.u32 %v486, 7
      %v488 = vsub.s32 0, %v487
      %v489 = vrot.slane %v484, %v488
      %v490 = vlaneseq
      %v491 = vshrl.u32 %v490, 7
      %v492 = vsub.s32 1, %v491
      %v493 = vrot.slane %v484, %v492
      %v496 = vadd.f32 %v480, %v489
      %v497 = vadd.f32 %v481, %v493
      %v498 = vadd.f32 %v482, %v489
      %v499 = vadd.f32 %v483, %v493
      %500 = vst [vmem:[%s170] sm:$0xff] %v496
      %501 = vst [vmem:[%s170 + $0x8] sm:$0xff] %v497
      %502 = vst [vmem:[%s170 + $0x10] sm:$0xff] %v498
      %503 = vst [vmem:[%s170 + $0x18] sm:$0xff] %v499
      %p504 = scmp.lt.s32.totalorder %s14, 1
      %s505 = scalar_select %p504, %s14, 1
      %s506 = smul.addr %s505, 4
      %s507 = smul.addr %s506, 8
      %s508 = scalar_lea.vmem %s3, %s507
      // Predicated region
      $region33: #{upsample_forward.1} parent=31 // pred_check
        %p509 = pneg %p100
      $region34: #{upsample_forward.1} parent=31 // pred_check_branch
        %511 = sbr.rel (%p509) target = $region36
      $region35: #{upsample_forward.1} parent=31 // pred_region
        _
      $region36: #{upsample_forward.1} parent=31 // pred_fallthru
        _
    $region32: #{upsample_forward.1} parent=5 // pred_fallthru
      _
    %p512 = scmp.le.s32.totalorder 2, %s9
    // Predicated region
    $region37: #{upsample_forward.1} parent=5 // pred_check
      %p513 = pneg %p512
    $region38: #{upsample_forward.1} parent=5 // pred_check_branch
      %515 = sbr.rel (%p513) target = $region40
    $region39: #{upsample_forward.1} parent=5 // pred_region
      %s516 = ssub.s32 %s9, 2
      // Predicated region
      $region41: #{upsample_forward.1} parent=39 // pred_check
        %p517 = pneg %p106
      $region42: #{upsample_forward.1} parent=39 // pred_check_branch
        %519 = sbr.rel (%p517) target = $region44
      $region43: #{upsample_forward.1} parent=39 // pred_region
        %p520 = scmp.lt.s32.totalorder %s15, 1
        %s521 = scalar_select %p520, %s15, 1
        %s522 = smul.addr %s521, 4
        %s523 = smul.addr %s522, 8
        %s524 = scalar_lea.vmem %s3, %s523
      $region44: #{upsample_forward.1} parent=39 // pred_fallthru
        _
    $region40: #{upsample_forward.1} parent=5 // pred_fallthru
      _
  $region6: #{upsample_forward.1} parent=0 // loop_footer
    %s13 = sadd.s32 1, %s9
  $region7: #{upsample_forward.1} parent=0 // loop_footer_branch
    %8 = sbr.rel target = $region3
  $region8: #{upsample_forward.1} parent=0 // loop_exit
    _

</llo_original>
